<compile_context>
chip_gen: v5e
topology: v5e:2x2
jax: 0.10.0
libtpu: 0.0.40
codegen_flags: <defaults>
</compile_context>

<pallas_src>
import jax
import jax.numpy as jnp
from jax.experimental import pallas as pl
from jax.experimental.pallas import tpu as pltpu


_LANE = 128
# Budget for the double-buffered input blocks (2 buffers x 3 inputs). 24 MiB
# leaves headroom under the 32 MiB scoped-VMEM limit we request below and fits
# comfortably inside v7x's 64 MiB physical VMEM.
_VMEM_INPUT_BUDGET = 24 << 20


def _round_up(x, m):
    return (x + m - 1) // m * m


def _choose_layout(n_pad, pt_itemsize):
    """Pick (rows-per-block, mask dtype).

    Row counts are multiples of each dtype's native sublane packing
    (f32:8, bf16:16, int8:32) so every block lowers to native-layout loads.
    Prefer the int8 mask (fewest HBM bytes) with 32-row blocks when it fits
    the VMEM budget.
    """
    for tb, m_dtype in ((32, jnp.int8), (16, jnp.bfloat16), (8, jnp.float32)):
        m_isz = jnp.dtype(m_dtype).itemsize
        if 2 * tb * n_pad * (2 * pt_itemsize + m_isz) <= _VMEM_INPUT_BUDGET:
            return tb, m_dtype
    # TODO(synk): for images so large that even an 8-row f32 block exceeds the
    # budget, chunk H*W with a two-pass (moments, then abs-err) structure;
    # not needed for current shapes.
    return 8, jnp.float32


def _ssi_rows_kernel(pred_ref, targ_ref, mask_ref, num_ref, cnt_ref):
    # Block shapes: pred/targ/mask (TB, N_pad); num/cnt (TB, 1).
    p = pred_ref[...].astype(jnp.float32)
    t = targ_ref[...].astype(jnp.float32)
    m = mask_ref[...].astype(jnp.float32)

    # Reuse masked products across the moments and the abs-error pass.
    mp = m * p
    mt = m * t

    # Masked moments, vectorized over the TB image rows.
    a00 = jnp.sum(mp * p, axis=1, keepdims=True)   # (TB, 1)
    a01 = jnp.sum(mp, axis=1, keepdims=True)
    a11 = jnp.sum(m, axis=1, keepdims=True)
    b0 = jnp.sum(mp * t, axis=1, keepdims=True)
    b1 = jnp.sum(mt, axis=1, keepdims=True)

    # 2x2 solve (scale, shift); zero when det <= 0, matching the reference.
    det = a00 * a11 - a01 * a01
    valid = det > 0.0
    inv_det = jnp.where(valid, 1.0 / jnp.where(valid, det, 1.0), 0.0)
    scale = (a11 * b0 - a01 * b1) * inv_det
    shift = (a00 * b1 - a01 * b0) * inv_det

    # Masked absolute error of the scaled/shifted prediction (p,t,m are still
    # resident in VMEM -> no extra HBM traffic for this second pass).
    num_ref[...] = jnp.sum(m * jnp.abs(scale * p + shift - t),
                           axis=1, keepdims=True)
    cnt_ref[...] = a11


def scale_and_shift_invariant_loss(prediction, target, mask):
    """JAX/Pallas equivalent of ScaleAndShiftInvariantLoss.forward.

    prediction, target: (B, 1, H, W) or (B, H, W) float
    mask:               (B, 1, H, W) or (B, H, W) bool (or 0/1)
    returns scalar float32 loss.
    """
    if prediction.ndim == 4:
        prediction = prediction[:, 0]
    if target.ndim == 4:
        target = target[:, 0]
    if mask.ndim == 4:
        mask = mask[:, 0]

    B, H, W = prediction.shape
    n = H * W
    n_pad = _round_up(n, _LANE)

    # Keep bf16 prediction/target in HBM (cast to f32 inside the kernel);
    # everything else is widened/narrowed to f32 in the wrapper.
    pt_dtype = jnp.bfloat16 if prediction.dtype == jnp.bfloat16 else jnp.float32

    tb, mask_dtype = _choose_layout(n_pad, jnp.dtype(pt_dtype).itemsize)
    if tb < 16 and pt_dtype == jnp.bfloat16:
        pt_dtype = jnp.float32  # keep native sublane packing in the fallback

    b_pad = _round_up(max(B, tb), tb)

    # Flatten to lane-dense (B, H*W) and zero-pad both the lane and batch dims.
    pred = prediction.astype(pt_dtype).reshape(B, n)
    targ = target.astype(pt_dtype).reshape(B, n)
    mflt = mask.astype(mask_dtype).reshape(B, n)
    pad = ((0, b_pad - B), (0, n_pad - n))
    pred = jnp.pad(pred, pad)
    targ = jnp.pad(targ, pad)
    mflt = jnp.pad(mflt, pad)

    pt_isz = jnp.dtype(pt_dtype).itemsize
    m_isz = jnp.dtype(mask_dtype).itemsize
    block_bytes = tb * n_pad * (2 * pt_isz + m_isz)
    vmem_limit = int(max(32 << 20, min(2 * block_bytes + (8 << 20), 64 << 20)))

    img_spec = pl.BlockSpec((tb, n_pad), lambda i: (i, 0))
    row_out_spec = pl.BlockSpec((tb, 1), lambda i: (i, 0))

    num, cnt = pl.pallas_call(
        _ssi_rows_kernel,
        out_shape=(
            jax.ShapeDtypeStruct((b_pad, 1), jnp.float32),
            jax.ShapeDtypeStruct((b_pad, 1), jnp.float32),
        ),
        grid=(b_pad // tb,),
        in_specs=[img_spec, img_spec, img_spec],
        out_specs=(row_out_spec, row_out_spec),
        compiler_params=pltpu.CompilerParams(
            dimension_semantics=("parallel",),   # independent per-image work
            vmem_limit_bytes=vmem_limit,
        ),
    )(pred, targ, mflt)

    # Global mean over all masked elements (padded rows contribute zeros).
    # Note: sum(cnt) == 0 (fully masked batch) yields NaN, matching the
    # PyTorch reference behaviour.
    return jnp.sum(num) / jnp.sum(cnt)


def _reference_loss(prediction, target, mask):
    """Pure-JAX reference mirroring the PyTorch module."""
    p = prediction[:, 0].astype(jnp.float32)
    t = target[:, 0].astype(jnp.float32)
    m = mask[:, 0].astype(jnp.float32)
    a00 = jnp.sum(m * p * p, axis=(1, 2))
    a01 = jnp.sum(m * p, axis=(1, 2))
    a11 = jnp.sum(m, axis=(1, 2))
    b0 = jnp.sum(m * p * t, axis=(1, 2))
    b1 = jnp.sum(m * t, axis=(1, 2))
    det = a00 * a11 - a01 * a01
    valid = det > 0
    inv = jnp.where(valid, 1.0 / jnp.where(valid, det, 1.0), 0.0)
    scale = (a11 * b0 - a01 * b1) * inv
    shift = (-a01 * b0 + a00 * b1) * inv
    sp = scale[:, None, None] * p + shift[:, None, None]
    return jnp.sum(m * jnp.abs(sp - t)) / jnp.sum(m)


if __name__ == "__main__":
    key = jax.random.PRNGKey(0)
    k1, k2, k3 = jax.random.split(key, 3)

    B, C, H, W = 2, 1, 16, 16
    prediction = jax.random.normal(k1, (B, C, H, W), dtype=jnp.float32)
    target = jax.random.normal(k2, (B, C, H, W), dtype=jnp.float32) * 2.0 + 0.5
    mask = jax.random.bernoulli(k3, p=0.7, shape=(B, C, H, W))

    loss = scale_and_shift_invariant_loss(prediction, target, mask)
    loss = jax.block_until_ready(loss)

    ref = _reference_loss(prediction, target, mask)
    assert jnp.allclose(loss, ref, rtol=1e-4, atol=1e-4), (loss, ref)

    print("KERNEL_OK")
</pallas_src>

<mosaic_0001>
module attributes {stable_mosaic.version = 11 : i64} {
  func.func @_ssi_rows_kernel(%arg0: i32, %arg1: memref<32x256xf32, #tpu.memory_space<vmem>>, %arg2: memref<32x256xf32, #tpu.memory_space<vmem>>, %arg3: memref<32x256xi8, #tpu.memory_space<vmem>>, %arg4: memref<32x1xf32, #tpu.memory_space<vmem>>, %arg5: memref<32x1xf32, #tpu.memory_space<vmem>>) attributes {dimension_semantics = [#tpu.dimension_semantics<parallel>], iteration_bounds = array<i64: 1>, scalar_prefetch = 0 : i64, scratch_operands = 0 : i64, tpu.core_type = #tpu.core_type<tc>, window_params = [{transform_indices = @transform_0, window_bounds = array<i64: 32, 256>}, {transform_indices = @transform_1, window_bounds = array<i64: 32, 256>}, {transform_indices = @transform_2, window_bounds = array<i64: 32, 256>}, {transform_indices = @transform_3, window_bounds = array<i64: 32, 1>}, {transform_indices = @transform_4, window_bounds = array<i64: 32, 1>}]} {
    %c0 = arith.constant 0 : index
    %c0_0 = arith.constant 0 : index
    %0 = vector.load %arg1[%c0, %c0_0] : memref<32x256xf32, #tpu.memory_space<vmem>>, vector<32x256xf32>
    %c0_1 = arith.constant 0 : index
    %c0_2 = arith.constant 0 : index
    %1 = vector.load %arg2[%c0_1, %c0_2] : memref<32x256xf32, #tpu.memory_space<vmem>>, vector<32x256xf32>
    %c0_3 = arith.constant 0 : index
    %c0_4 = arith.constant 0 : index
    %2 = vector.load %arg3[%c0_3, %c0_4] : memref<32x256xi8, #tpu.memory_space<vmem>>, vector<32x256xi8>
    %3 = arith.sitofp %2 : vector<32x256xi8> to vector<32x256xf32>
    %4 = arith.mulf %3, %0 : vector<32x256xf32>
    %5 = arith.mulf %3, %1 : vector<32x256xf32>
    %6 = arith.mulf %4, %0 : vector<32x256xf32>
    %cst = arith.constant dense<0.000000e+00> : vector<32xf32>
    %7 = vector.multi_reduction <add>, %6, %cst [1] : vector<32x256xf32> to vector<32xf32>
    %8 = vector.shape_cast %7 : vector<32xf32> to vector<32x1xf32>
    %cst_5 = arith.constant dense<0.000000e+00> : vector<32xf32>
    %9 = vector.multi_reduction <add>, %4, %cst_5 [1] : vector<32x256xf32> to vector<32xf32>
    %10 = vector.shape_cast %9 : vector<32xf32> to vector<32x1xf32>
    %cst_6 = arith.constant dense<0.000000e+00> : vector<32xf32>
    %11 = vector.multi_reduction <add>, %3, %cst_6 [1] : vector<32x256xf32> to vector<32xf32>
    %12 = vector.shape_cast %11 : vector<32xf32> to vector<32x1xf32>
    %13 = arith.mulf %4, %1 : vector<32x256xf32>
    %cst_7 = arith.constant dense<0.000000e+00> : vector<32xf32>
    %14 = vector.multi_reduction <add>, %13, %cst_7 [1] : vector<32x256xf32> to vector<32xf32>
    %15 = vector.shape_cast %14 : vector<32xf32> to vector<32x1xf32>
    %cst_8 = arith.constant dense<0.000000e+00> : vector<32xf32>
    %16 = vector.multi_reduction <add>, %5, %cst_8 [1] : vector<32x256xf32> to vector<32xf32>
    %17 = vector.shape_cast %16 : vector<32xf32> to vector<32x1xf32>
    %18 = arith.mulf %8, %12 : vector<32x1xf32>
    %19 = arith.mulf %10, %10 : vector<32x1xf32>
    %20 = arith.subf %18, %19 : vector<32x1xf32>
    %cst_9 = arith.constant 0.000000e+00 : f32
    %21 = vector.broadcast %cst_9 : f32 to vector<32x1xf32>
    %22 = arith.cmpf ogt, %20, %21 : vector<32x1xf32>
    %cst_10 = arith.constant 1.000000e+00 : f32
    %23 = vector.broadcast %cst_10 : f32 to vector<32x1xf32>
    %24 = arith.select %22, %20, %23 : vector<32x1xi1>, vector<32x1xf32>
    %cst_11 = arith.constant 1.000000e+00 : f32
    %25 = vector.broadcast %cst_11 : f32 to vector<32x1xf32>
    %26 = arith.divf %25, %24 : vector<32x1xf32>
    %cst_12 = arith.constant 0.000000e+00 : f32
    %27 = vector.broadcast %cst_12 : f32 to vector<32x1xf32>
    %28 = arith.select %22, %26, %27 : vector<32x1xi1>, vector<32x1xf32>
    %29 = arith.mulf %12, %15 : vector<32x1xf32>
    %30 = arith.mulf %10, %17 : vector<32x1xf32>
    %31 = arith.subf %29, %30 : vector<32x1xf32>
    %32 = arith.mulf %31, %28 : vector<32x1xf32>
    %33 = arith.mulf %8, %17 : vector<32x1xf32>
    %34 = arith.mulf %10, %15 : vector<32x1xf32>
    %35 = arith.subf %33, %34 : vector<32x1xf32>
    %36 = arith.mulf %35, %28 : vector<32x1xf32>
    %37 = vector.broadcast %32 : vector<32x1xf32> to vector<32x256xf32>
    %38 = arith.mulf %37, %0 : vector<32x256xf32>
    %39 = vector.broadcast %36 : vector<32x1xf32> to vector<32x256xf32>
    %40 = arith.addf %38, %39 : vector<32x256xf32>
    %41 = arith.subf %40, %1 : vector<32x256xf32>
    %42 = math.absf %41 : vector<32x256xf32>
    %43 = arith.mulf %3, %42 : vector<32x256xf32>
    %cst_13 = arith.constant dense<0.000000e+00> : vector<32xf32>
    %44 = vector.multi_reduction <add>, %43, %cst_13 [1] : vector<32x256xf32> to vector<32xf32>
    %45 = vector.shape_cast %44 : vector<32xf32> to vector<32x1xf32>
    %c0_14 = arith.constant 0 : index
    %c0_15 = arith.constant 0 : index
    %46 = vector.load %arg4[%c0_14, %c0_15] : memref<32x1xf32, #tpu.memory_space<vmem>>, vector<32x1xf32>
    tpu.vector_store %arg4[%c0_14, %c0_15], %45 {strides = array<i32>} : memref<32x1xf32, #tpu.memory_space<vmem>>, vector<32x1xf32>,
    %c0_16 = arith.constant 0 : index
    %c0_17 = arith.constant 0 : index
    %47 = vector.load %arg5[%c0_16, %c0_17] : memref<32x1xf32, #tpu.memory_space<vmem>>, vector<32x1xf32>
    tpu.vector_store %arg5[%c0_16, %c0_17], %12 {strides = array<i32>} : memref<32x1xf32, #tpu.memory_space<vmem>>, vector<32x1xf32>,
    return
  }
  func.func @transform_0(%arg0: i32) -> (i32, i32) {
    %c0_i32 = arith.constant 0 : i32
    %c0_i32_0 = arith.constant 0 : i32
    return %arg0, %c0_i32 : i32, i32
  }
  func.func @transform_1(%arg0: i32) -> (i32, i32) {
    %c0_i32 = arith.constant 0 : i32
    %c0_i32_0 = arith.constant 0 : i32
    return %arg0, %c0_i32 : i32, i32
  }
  func.func @transform_2(%arg0: i32) -> (i32, i32) {
    %c0_i32 = arith.constant 0 : i32
    %c0_i32_0 = arith.constant 0 : i32
    return %arg0, %c0_i32 : i32, i32
  }
  func.func @transform_3(%arg0: i32) -> (i32, i32) {
    %c0_i32 = arith.constant 0 : i32
    %c0_i32_0 = arith.constant 0 : i32
    return %arg0, %c0_i32 : i32, i32
  }
  func.func @transform_4(%arg0: i32) -> (i32, i32) {
    %c0_i32 = arith.constant 0 : i32
    %c0_i32_0 = arith.constant 0 : i32
    return %arg0, %c0_i32 : i32, i32
  }
}

</mosaic_0001>

<llo_original>
// kernel: tpu_custom_call.1
$region0: #{tpu_custom_call.1}
  #allocation0 [shape = 'u32[]', space=smem, size = 0x4, offset = 0x4, fixed_abs, tag = 'smem constant byte address 0x4 - core index']
  #allocation1 [shape = 'u32[72,128]{1,0:T(1,128)}', space=vmem, size = 0x9000, scoped, tag = 'internal scratch']
  %s0 = inlined_call_operand.hbm [shape: f32[32,256], index: 0, kind: input, shape index: {}]
  %s1 = inlined_call_operand.hbm [shape: f32[32,256], index: 1, kind: input, shape index: {}]
  %s2 = inlined_call_operand.hbm [shape: s8[32,256], index: 2, kind: input, shape index: {}]
  %s3 = inlined_call_operand.vmem [shape: f32[32,1], index: 3, kind: output, shape index: {0}]
  %s4 = inlined_call_operand.vmem [shape: f32[32,1], index: 4, kind: output, shape index: {1}]
  %5 = xla_tuple %s3, %s4
  %s6 = sld [smem:[#allocation0]]
  $region42: #{tpu_custom_call.1} parent=0
    _
  %s8 = ssub.s32 1, %s6
  %s9 = scalar_select 0, %s8, %s6
  $region1: #{tpu_custom_call.1} parent=0
    #allocation2 [shape = 'u8[32768]{0}', space=vmem, size = 0x8000, scoped, tag = 'input window, operand 0, single buffered']
    #allocation3 [shape = 's32[1]{0}', space=sflag, size = 0x4, scoped, tag = 'scoped memory for tpu_custom_call.1']
    #allocation4 [shape = 'u8[32768]{0}', space=vmem, size = 0x8000, scoped, tag = 'input window, operand 1, single buffered']
    #allocation5 [shape = 's32[1]{0}', space=sflag, size = 0x4, scoped, tag = 'scoped memory for tpu_custom_call.1']
    #allocation6 [shape = 'u8[8192]{0}', space=vmem, size = 0x2000, scoped, tag = 'input window, operand 2, single buffered']
    %10 = vsyncpa [#allocation3], 0
    %11 = vsyncpa [#allocation5], 0
    // Predicated region
    $region2: #{tpu_custom_call.1} parent=1 // pred_check
      _
    $region3: #{tpu_custom_call.1} parent=1 // pred_check_branch
      %13 = sbr.rel (0) target = $region5
    $region4: #{tpu_custom_call.1} parent=1 // pred_region
      %15 = vsyncadd [#allocation3], 0
      %s16 = sshll.u32 %s0, 4
      %s17 = int_to_ptr.hbm [resolvable:$true] %s16
      %s18 = sshll.u32 [#allocation2], 4
      %s19 = int_to_ptr.vmem [resolvable:$true] %s18
      %24 = dma.hbm_to_vmem [thread:$0]  %s17, 1024, %s19, [#allocation3], 256, 256, 16
    $region5: #{tpu_custom_call.1} parent=1 // pred_fallthru
      _
    // Predicated region
    $region6: #{tpu_custom_call.1} parent=1 // pred_check
      _
    $region7: #{tpu_custom_call.1} parent=1 // pred_check_branch
      %26 = sbr.rel (0) target = $region9
    $region8: #{tpu_custom_call.1} parent=1 // pred_region
      %28 = vsyncadd [#allocation5], 0
      %s29 = sshll.u32 %s1, 4
      %s30 = int_to_ptr.hbm [resolvable:$true] %s29
      %s31 = sshll.u32 [#allocation4], 4
      %s32 = int_to_ptr.vmem [resolvable:$true] %s31
      %37 = dma.hbm_to_vmem [thread:$0]  %s30, 1024, %s32, [#allocation5], 256, 256, 16
    $region9: #{tpu_custom_call.1} parent=1 // pred_fallthru
      _
    // Predicated region
    $region10: #{tpu_custom_call.1} parent=1 // pred_check
      _
    $region11: #{tpu_custom_call.1} parent=1 // pred_check_branch
      %39 = sbr.rel (0) target = $region13
    $region12: #{tpu_custom_call.1} parent=1 // pred_region
      %41 = vsyncadd [#allocation5], 0
      %s43 = sshll.u32 %s2, 4
      %s44 = int_to_ptr.hbm [resolvable:$true] %s43
      %s45 = sshll.u32 [#allocation6], 4
      %s46 = int_to_ptr.vmem [resolvable:$true] %s45
      %48 = dma.hbm_to_vmem [thread:$0]  %s44, 256, %s46, [#allocation5]
    $region13: #{tpu_custom_call.1} parent=1 // pred_fallthru
      _
    // Predicated region
    $region14: #{tpu_custom_call.1} parent=1 // pred_check
      _
    $region15: #{tpu_custom_call.1} parent=1 // pred_check_branch
      %50 = sbr.rel (0) target = $region17
    $region16: #{tpu_custom_call.1} parent=1 // pred_region
      %52 = dma.done [#allocation3], 1024
    $region17: #{tpu_custom_call.1} parent=1 // pred_fallthru
      _
    // Predicated region
    $region18: #{tpu_custom_call.1} parent=1 // pred_check
      _
    $region19: #{tpu_custom_call.1} parent=1 // pred_check_branch
      %54 = sbr.rel (0) target = $region21
    $region20: #{tpu_custom_call.1} parent=1 // pred_region
      %56 = dma.done [#allocation5], 1024
    $region21: #{tpu_custom_call.1} parent=1 // pred_fallthru
      _
    // Predicated region
    $region22: #{tpu_custom_call.1} parent=1 // pred_check
      _
    $region23: #{tpu_custom_call.1} parent=1 // pred_check_branch
      %58 = sbr.rel (0) target = $region25
    $region24: #{tpu_custom_call.1} parent=1 // pred_region
      %60 = dma.done [#allocation5], 256
    $region25: #{tpu_custom_call.1} parent=1 // pred_fallthru
      _
    %v61 = vld [vmem:[#allocation2] sm:$0xff]
    %v62 = vld [vmem:[#allocation2 + $0x8] sm:$0xff]
    %v63 = vld [vmem:[#allocation2 + $0x10] sm:$0xff]
    %v64 = vld [vmem:[#allocation2 + $0x18] sm:$0xff]
    %v65 = vld [vmem:[#allocation2 + $0x20] sm:$0xff]
    %v66 = vld [vmem:[#allocation2 + $0x28] sm:$0xff]
    %v67 = vld [vmem:[#allocation2 + $0x30] sm:$0xff]
    %v68 = vld [vmem:[#allocation2 + $0x38] sm:$0xff]
    %v69 = vld [vmem:[#allocation4] sm:$0xff]
    %v70 = vld [vmem:[#allocation4 + $0x8] sm:$0xff]
    %v71 = vld [vmem:[#allocation4 + $0x10] sm:$0xff]
    %v72 = vld [vmem:[#allocation4 + $0x18] sm:$0xff]
    %v73 = vld [vmem:[#allocation4 + $0x20] sm:$0xff]
    %v74 = vld [vmem:[#allocation4 + $0x28] sm:$0xff]
    %v75 = vld [vmem:[#allocation4 + $0x30] sm:$0xff]
    %v76 = vld [vmem:[#allocation4 + $0x38] sm:$0xff]
    %v77 = vld [vmem:[#allocation6] sm:$0xff]
    %v78 = vld [vmem:[#allocation6 + $0x8] sm:$0xff]
    %v79 = vunpack.c.0.s8 %v77
    %v80 = vunpack.c.0.s8 %v78
    %v81 = vunpack.c.1.s8 %v77
    %v82 = vunpack.c.1.s8 %v78
    %v83 = vunpack.c.2.s8 %v77
    %v84 = vunpack.c.2.s8 %v78
    %v85 = vunpack.c.3.s8 %v77
    %v86 = vunpack.c.3.s8 %v78
    %v87 = vcvt.s32.f32 %v79
    %v88 = vcvt.s32.f32 %v80
    %v89 = vcvt.s32.f32 %v81
    %v90 = vcvt.s32.f32 %v82
    %v91 = vcvt.s32.f32 %v83
    %v92 = vcvt.s32.f32 %v84
    %v93 = vcvt.s32.f32 %v85
    %v94 = vcvt.s32.f32 %v86
    %v95 = vmul.f32 %v87, %v61
    %v96 = vmul.f32 %v88, %v62
    %v97 = vmul.f32 %v89, %v63
    %v98 = vmul.f32 %v90, %v64
    %v99 = vmul.f32 %v91, %v65
    %v100 = vmul.f32 %v92, %v66
    %v101 = vmul.f32 %v93, %v67
    %v102 = vmul.f32 %v94, %v68
    %v103 = vmul.f32 %v87, %v69
    %v104 = vmul.f32 %v88, %v70
    %v105 = vmul.f32 %v89, %v71
    %v106 = vmul.f32 %v90, %v72
    %v107 = vmul.f32 %v91, %v73
    %v108 = vmul.f32 %v92, %v74
    %v109 = vmul.f32 %v93, %v75
    %v110 = vmul.f32 %v94, %v76
    %v111 = vmul.f32 %v95, %v61
    %v112 = vmul.f32 %v96, %v62
    %v113 = vmul.f32 %v97, %v63
    %v114 = vmul.f32 %v98, %v64
    %v115 = vmul.f32 %v99, %v65
    %v116 = vmul.f32 %v100, %v66
    %v117 = vmul.f32 %v101, %v67
    %v118 = vmul.f32 %v102, %v68
    %v119 = vadd.f32 %v111, %v112
    %120 = vadd.xlane.f32.xlu0 %v119
    %v121 = vpop.xlane.xlu0 %120
    %v122 = vadd.f32 %v113, %v114
    %123 = vadd.xlane.f32.xlu0 %v122
    %v124 = vpop.xlane.xlu0 %123
    %v125 = vadd.f32 %v115, %v116
    %126 = vadd.xlane.f32.xlu0 %v125
    %v127 = vpop.xlane.xlu0 %126
    %v128 = vadd.f32 %v117, %v118
    %129 = vadd.xlane.f32.xlu0 %v128
    %v130 = vpop.xlane.xlu0 %129
    %v131 = vadd.f32 %v95, %v96
    %132 = vadd.xlane.f32.xlu0 %v131
    %v133 = vpop.xlane.xlu0 %132
    %v134 = vadd.f32 %v97, %v98
    %135 = vadd.xlane.f32.xlu0 %v134
    %v136 = vpop.xlane.xlu0 %135
    %v137 = vadd.f32 %v99, %v100
    %138 = vadd.xlane.f32.xlu0 %v137
    %v139 = vpop.xlane.xlu0 %138
    %v140 = vadd.f32 %v101, %v102
    %141 = vadd.xlane.f32.xlu0 %v140
    %v142 = vpop.xlane.xlu0 %141
    %v143 = vadd.f32 %v87, %v88
    %144 = vadd.xlane.f32.xlu0 %v143
    %v145 = vpop.xlane.xlu0 %144
    %v146 = vadd.f32 %v89, %v90
    %147 = vadd.xlane.f32.xlu0 %v146
    %v148 = vpop.xlane.xlu0 %147
    %v149 = vadd.f32 %v91, %v92
    %150 = vadd.xlane.f32.xlu0 %v149
    %v151 = vpop.xlane.xlu0 %150
    %v152 = vadd.f32 %v93, %v94
    %153 = vadd.xlane.f32.xlu0 %v152
    %v154 = vpop.xlane.xlu0 %153
    %v155 = vmul.f32 %v95, %v69
    %v156 = vmul.f32 %v96, %v70
    %v157 = vmul.f32 %v97, %v71
    %v158 = vmul.f32 %v98, %v72
    %v159 = vmul.f32 %v99, %v73
    %v160 = vmul.f32 %v100, %v74
    %v161 = vmul.f32 %v101, %v75
    %v162 = vmul.f32 %v102, %v76
    %v163 = vadd.f32 %v155, %v156
    %164 = vadd.xlane.f32.xlu0 %v163
    %v165 = vpop.xlane.xlu0 %164
    %v166 = vadd.f32 %v157, %v158
    %167 = vadd.xlane.f32.xlu0 %v166
    %v168 = vpop.xlane.xlu0 %167
    %v169 = vadd.f32 %v159, %v160
    %170 = vadd.xlane.f32.xlu0 %v169
    %v171 = vpop.xlane.xlu0 %170
    %v172 = vadd.f32 %v161, %v162
    %173 = vadd.xlane.f32.xlu0 %v172
    %v174 = vpop.xlane.xlu0 %173
    %v175 = vadd.f32 %v103, %v104
    %176 = vadd.xlane.f32.xlu0 %v175
    %v177 = vpop.xlane.xlu0 %176
    %v178 = vadd.f32 %v105, %v106
    %179 = vadd.xlane.f32.xlu0 %v178
    %v180 = vpop.xlane.xlu0 %179
    %v181 = vadd.f32 %v107, %v108
    %182 = vadd.xlane.f32.xlu0 %v181
    %v183 = vpop.xlane.xlu0 %182
    %v184 = vadd.f32 %v109, %v110
    %185 = vadd.xlane.f32.xlu0 %v184
    %v186 = vpop.xlane.xlu0 %185
    %v187 = vmul.f32 %v121, %v145
    %v188 = vmul.f32 %v124, %v148
    %v189 = vmul.f32 %v127, %v151
    %v190 = vmul.f32 %v130, %v154
    %v191 = vmul.f32 %v133, %v133
    %v192 = vmul.f32 %v136, %v136
    %v193 = vmul.f32 %v139, %v139
    %v194 = vmul.f32 %v142, %v142
    %v195 = vsub.f32 %v187, %v191
    %v196 = vsub.f32 %v188, %v192
    %v197 = vsub.f32 %v189, %v193
    %v198 = vsub.f32 %v190, %v194
    %vm199 = vcmp.gt.f32.partialorder %v195, 0.0
    %vm200 = vcmp.gt.f32.partialorder %v196, 0.0
    %vm201 = vcmp.gt.f32.partialorder %v197, 0.0
    %vm202 = vcmp.gt.f32.partialorder %v198, 0.0
    %v203 = vsel %vm199, %v195, 1.0
    %v204 = vsel %vm200, %v196, 1.0
    %v205 = vsel %vm201, %v197, 1.0
    %v206 = vsel %vm202, %v198, 1.0
    %v207 = vrcp.pop %v203
    %v208 = vmul.f32 %v203, %v207
    %v209 = vsub.f32 1.0, %v208
    %v210 = vmul.f32 %v207, %v209
    %v211 = vadd.f32 %v207, %v210
    %vm212 = vweird.f32 %v203
    %vm213 = vweird.f32 %v207
    %vm214 = vmor %vm212, %vm213
    %v215 = vsel %vm214, %v207, %v211
    %v216 = vand.u32 2147483647, %v203
    %vm217 = vcmp.eq.f32.partialorder %v216, 8.507059e+37
    %v218 = vand.u32 %v203, 2147483648
    %v219 = vor.u32 1.1754944e-38, %v218
    %v220 = vsel %vm217, %v219, %v215
    %v221 = vmul.f32 1.0, %v220
    %v222 = vrcp.pop %v204
    %v223 = vmul.f32 %v204, %v222
    %v224 = vsub.f32 1.0, %v223
    %v225 = vmul.f32 %v222, %v224
    %v226 = vadd.f32 %v222, %v225
    %vm227 = vweird.f32 %v204
    %vm228 = vweird.f32 %v222
    %vm229 = vmor %vm227, %vm228
    %v230 = vsel %vm229, %v222, %v226
    %v231 = vand.u32 2147483647, %v204
    %vm232 = vcmp.eq.f32.partialorder %v231, 8.507059e+37
    %v233 = vand.u32 %v204, 2147483648
    %v234 = vor.u32 1.1754944e-38, %v233
    %v235 = vsel %vm232, %v234, %v230
    %v236 = vmul.f32 1.0, %v235
    %v237 = vrcp.pop %v205
    %v238 = vmul.f32 %v205, %v237
    %v239 = vsub.f32 1.0, %v238
    %v240 = vmul.f32 %v237, %v239
    %v241 = vadd.f32 %v237, %v240
    %vm242 = vweird.f32 %v205
    %vm243 = vweird.f32 %v237
    %vm244 = vmor %vm242, %vm243
    %v245 = vsel %vm244, %v237, %v241
    %v246 = vand.u32 2147483647, %v205
    %vm247 = vcmp.eq.f32.partialorder %v246, 8.507059e+37
    %v248 = vand.u32 %v205, 2147483648
    %v249 = vor.u32 1.1754944e-38, %v248
    %v250 = vsel %vm247, %v249, %v245
    %v251 = vmul.f32 1.0, %v250
    %v252 = vrcp.pop %v206
    %v253 = vmul.f32 %v206, %v252
    %v254 = vsub.f32 1.0, %v253
    %v255 = vmul.f32 %v252, %v254
    %v256 = vadd.f32 %v252, %v255
    %vm257 = vweird.f32 %v206
    %vm258 = vweird.f32 %v252
    %vm259 = vmor %vm257, %vm258
    %v260 = vsel %vm259, %v252, %v256
    %v261 = vand.u32 2147483647, %v206
    %vm262 = vcmp.eq.f32.partialorder %v261, 8.507059e+37
    %v263 = vand.u32 %v206, 2147483648
    %v264 = vor.u32 1.1754944e-38, %v263
    %v265 = vsel %vm262, %v264, %v260
    %v266 = vmul.f32 1.0, %v265
    %v267 = vsel %vm199, %v221, 0.0
    %v268 = vsel %vm200, %v236, 0.0
    %v269 = vsel %vm201, %v251, 0.0
    %v270 = vsel %vm202, %v266, 0.0
    %v271 = vmul.f32 %v145, %v165
    %v272 = vmul.f32 %v148, %v168
    %v273 = vmul.f32 %v151, %v171
    %v274 = vmul.f32 %v154, %v174
    %v275 = vmul.f32 %v133, %v177
    %v276 = vmul.f32 %v136, %v180
    %v277 = vmul.f32 %v139, %v183
    %v278 = vmul.f32 %v142, %v186
    %v279 = vsub.f32 %v271, %v275
    %v280 = vsub.f32 %v272, %v276
    %v281 = vsub.f32 %v273, %v277
    %v282 = vsub.f32 %v274, %v278
    %v283 = vmul.f32 %v279, %v267
    %v284 = vmul.f32 %v280, %v268
    %v285 = vmul.f32 %v281, %v269
    %v286 = vmul.f32 %v282, %v270
    %v287 = vmul.f32 %v121, %v177
    %v288 = vmul.f32 %v124, %v180
    %v289 = vmul.f32 %v127, %v183
    %v290 = vmul.f32 %v130, %v186
    %v291 = vmul.f32 %v133, %v165
    %v292 = vmul.f32 %v136, %v168
    %v293 = vmul.f32 %v139, %v171
    %v294 = vmul.f32 %v142, %v174
    %v295 = vsub.f32 %v287, %v291
    %v296 = vsub.f32 %v288, %v292
    %v297 = vsub.f32 %v289, %v293
    %v298 = vsub.f32 %v290, %v294
    %v299 = vmul.f32 %v295, %v267
    %v300 = vmul.f32 %v296, %v268
    %v301 = vmul.f32 %v297, %v269
    %v302 = vmul.f32 %v298, %v270
    %v303 = vmul.f32 %v283, %v61
    %v304 = vmul.f32 %v283, %v62
    %v305 = vmul.f32 %v284, %v63
    %v306 = vmul.f32 %v284, %v64
    %v307 = vmul.f32 %v285, %v65
    %v308 = vmul.f32 %v285, %v66
    %v309 = vmul.f32 %v286, %v67
    %v310 = vmul.f32 %v286, %v68
    %v311 = vadd.f32 %v303, %v299
    %v312 = vadd.f32 %v304, %v299
    %v313 = vadd.f32 %v305, %v300
    %v314 = vadd.f32 %v306, %v300
    %v315 = vadd.f32 %v307, %v301
    %v316 = vadd.f32 %v308, %v301
    %v317 = vadd.f32 %v309, %v302
    %v318 = vadd.f32 %v310, %v302
    %v319 = vsub.f32 %v311, %v69
    %v320 = vsub.f32 %v312, %v70
    %v321 = vsub.f32 %v313, %v71
    %v322 = vsub.f32 %v314, %v72
    %v323 = vsub.f32 %v315, %v73
    %v324 = vsub.f32 %v316, %v74
    %v325 = vsub.f32 %v317, %v75
    %v326 = vsub.f32 %v318, %v76
    %v327 = vand.u32 2147483647, %v319
    %v328 = vand.u32 2147483647, %v320
    %v329 = vand.u32 2147483647, %v321
    %v330 = vand.u32 2147483647, %v322
    %v331 = vand.u32 2147483647, %v323
    %v332 = vand.u32 2147483647, %v324
    %v333 = vand.u32 2147483647, %v325
    %v334 = vand.u32 2147483647, %v326
    %v335 = vmul.f32 %v87, %v327
    %v336 = vmul.f32 %v88, %v328
    %v337 = vmul.f32 %v89, %v329
    %v338 = vmul.f32 %v90, %v330
    %v339 = vmul.f32 %v91, %v331
    %v340 = vmul.f32 %v92, %v332
    %v341 = vmul.f32 %v93, %v333
    %v342 = vmul.f32 %v94, %v334
    %v343 = vadd.f32 %v335, %v336
    %344 = vadd.xlane.f32.xlu0 %v343
    %v345 = vpop.xlane.xlu0 %344
    %v346 = vadd.f32 %v337, %v338
    %347 = vadd.xlane.f32.xlu0 %v346
    %v348 = vpop.xlane.xlu0 %347
    %v349 = vadd.f32 %v339, %v340
    %350 = vadd.xlane.f32.xlu0 %v349
    %v351 = vpop.xlane.xlu0 %350
    %v352 = vadd.f32 %v341, %v342
    %353 = vadd.xlane.f32.xlu0 %v352
    %v354 = vpop.xlane.xlu0 %353
    %vm355 = vcmask 7168
    %356 = vst.msk [vmem:[%s3] sm:$0xff] %vm355, %v345
    %357 = vst.msk [vmem:[%s3 + $0x8] sm:$0xff] %vm355, %v348
    %358 = vst.msk [vmem:[%s3 + $0x10] sm:$0xff] %vm355, %v351
    %359 = vst.msk [vmem:[%s3 + $0x18] sm:$0xff] %vm355, %v354
    %360 = vst.msk [vmem:[%s4] sm:$0xff] %vm355, %v145
    %361 = vst.msk [vmem:[%s4 + $0x8] sm:$0xff] %vm355, %v148
    %362 = vst.msk [vmem:[%s4 + $0x10] sm:$0xff] %vm355, %v151
    %363 = vst.msk [vmem:[%s4 + $0x18] sm:$0xff] %vm355, %v154
    // Predicated region
    $region26: #{tpu_custom_call.1} parent=1 // pred_check
      _
    $region27: #{tpu_custom_call.1} parent=1 // pred_check_branch
      %365 = sbr.rel (0) target = $region29
    $region28: #{tpu_custom_call.1} parent=1 // pred_region
      _
    $region29: #{tpu_custom_call.1} parent=1 // pred_fallthru
      _
    // Predicated region
    $region30: #{tpu_custom_call.1} parent=1 // pred_check
      _
    $region31: #{tpu_custom_call.1} parent=1 // pred_check_branch
      %367 = sbr.rel (0) target = $region33
    $region32: #{tpu_custom_call.1} parent=1 // pred_region
      _
    $region33: #{tpu_custom_call.1} parent=1 // pred_fallthru
      _
    // Predicated region
    $region34: #{tpu_custom_call.1} parent=1 // pred_check
      _
    $region35: #{tpu_custom_call.1} parent=1 // pred_check_branch
      %369 = sbr.rel (0) target = $region37
    $region36: #{tpu_custom_call.1} parent=1 // pred_region
      _
    $region37: #{tpu_custom_call.1} parent=1 // pred_fallthru
      _
    // Predicated region
    $region38: #{tpu_custom_call.1} parent=1 // pred_check
      _
    $region39: #{tpu_custom_call.1} parent=1 // pred_check_branch
      %371 = sbr.rel (0) target = $region41
    $region40: #{tpu_custom_call.1} parent=1 // pred_region
      _
    $region41: #{tpu_custom_call.1} parent=1 // pred_fallthru
      _
    %372 = vsyncpa [#allocation3], 1
    %373 = vsyncpa [#allocation5], 1

</llo_original>
